<compile_context>
chip_gen: v7x
topology: tpu7x:2x2x1
jax: 0.10.0
libtpu: 0.0.40
codegen_flags: <defaults>
</compile_context>

<pallas_src>
from itertools import combinations_with_replacement

import jax
import jax.numpy as jnp
from jax.experimental import pallas as pl
from jax.experimental.pallas import tpu as pltpu


def _round_up(a, m):
    return (a + m - 1) // m * m


def _cdiv(a, b):
    return -(-a // b)


def _poly_kernel(x_ref, w_ref, b_ref, o_ref):
    """x_ref: (TB, D); w_ref: (D, (D+1)*n_pad); b_ref: (1, n_pad); o_ref: (TB, N)."""
    x = x_ref[...]                                   # (TB, D)
    d = x.shape[1]
    n_pad = b_ref.shape[1]
    n_out = o_ref.shape[1]
    xm = x.astype(w_ref.dtype)

    # Fused per-block matmul + epilogue MAC: single live (TB, n_pad) f32 block.
    acc = jnp.dot(xm, w_ref[:, :n_pad], preferred_element_type=jnp.float32)
    acc = acc + b_ref[...].astype(jnp.float32)
    for i in range(d):                               # static, short (D small)
        blk = jnp.dot(xm, w_ref[:, (i + 1) * n_pad:(i + 2) * n_pad],
                      preferred_element_type=jnp.float32)
        acc = acc + x[:, i:i + 1].astype(jnp.float32) * blk

    # Store only the real N output lanes (masked vst when N < 128): cuts HBM
    # writeback bytes 4x at N=32 and removes the post-kernel slice copy.
    o_ref[...] = acc[:, :n_out].astype(o_ref.dtype)


def prepack_polynomial_params(weights, bias, input_dim, degree,
                              operand_dtype=jnp.float32):
    """Fold the combinations_with_replacement feature map into an expanded,
    pre-transposed weight matrix.  Call ONCE at parameter-init time; the hot
    forward path then never pays the scatter / transpose / pad.

    Returns (w_big, b_row, num_neurons) with
        w_big : (D, (D+1)*n_pad)   block 0 = linear weights,
                                   block i+1 = quadratic weights for partner i
        b_row : (1, n_pad) float32
    Each unordered pair (i, j), i <= j, is placed in exactly one slot, so
    symmetric products are not double counted.
    """
    # The PyTorch module's __init__ num_outputs only matches forward for
    # degree == 2; any other degree is inconsistent in the original module.
    # TODO(synk): no general degree>2 path (original module is ill-defined there).
    assert degree == 2, "PolynomialLayer is only self-consistent for degree == 2"
    D = input_dim
    N, F = weights.shape
    combos = list(combinations_with_replacement(range(D), 2))
    assert F == D + len(combos), "weights shape inconsistent with input_dim/degree"

    n_pad = _round_up(N, 128)
    w = weights.astype(operand_dtype)

    # Linear block: (D, n_pad)
    w_lin = jnp.zeros((D, n_pad), operand_dtype).at[:, :N].set(
        jnp.transpose(w[:, :D]))

    # Quadratic weights scattered into (D, D, n_pad); one slot per pair (i<=j).
    rows_i = jnp.array([c[0] for c in combos], dtype=jnp.int32)
    rows_j = jnp.array([c[1] for c in combos], dtype=jnp.int32)
    wq3 = jnp.zeros((D, D, n_pad), operand_dtype)
    wq3 = wq3.at[rows_i, rows_j, :N].set(jnp.transpose(w[:, D:]))

    # W_big[k, (i+1)*n_pad + n] = wq3[i, k, n]; block 0 is the linear part.
    w_big = jnp.concatenate(
        [w_lin[:, None, :], jnp.transpose(wq3, (1, 0, 2))], axis=1
    ).reshape(D, (D + 1) * n_pad)

    b_row = jnp.zeros((1, n_pad), jnp.float32).at[0, :N].set(
        bias.astype(jnp.float32))
    return w_big, b_row, N


def polynomial_forward(x, w_big, b_row, num_neurons):
    """Pallas forward: x (B, D) -> (B, num_neurons), float32."""
    B, D = x.shape
    n_pad = b_row.shape[1]
    N = num_neurons
    assert w_big.shape == (D, (D + 1) * n_pad)

    # ---- batch tiling: VMEM-budgeted tile, even split (avoid near-2x padding
    #      for awkward B), >=2 grid steps when possible (v7x megacore). ----
    itemsize = 4
    vmem_budget = 12 * 2**20                          # under every gen's default scoped limit
    fixed = 2 * (w_big.size + b_row.size) * itemsize  # resident, double-buffered
    per_row = itemsize * (2 * D + 2 * N + 3 * n_pad)  # x/out buffers + live acc
    tb_cap = max(8, min(2048, (vmem_budget - fixed) // max(per_row, 1) // 8 * 8))

    num_tiles = _cdiv(B, tb_cap)
    if num_tiles == 1 and B >= 16:
        num_tiles = 2                  # span both v7x TensorCores; free on v5e/v6e
    TB = _round_up(_cdiv(B, num_tiles), 8)
    B_pad = _round_up(B, TB)
    grid = (B_pad // TB,)

    x_p = x if B_pad == B else jnp.pad(x, ((0, B_pad - B), (0, 0)))

    flops = 2 * B_pad * D * (D + 1) * n_pad + 3 * B_pad * D * n_pad
    bytes_accessed = (x_p.size * x_p.dtype.itemsize
                      + w_big.size * w_big.dtype.itemsize
                      + b_row.size * 4
                      + B_pad * N * 4)

    out = pl.pallas_call(
        _poly_kernel,
        out_shape=jax.ShapeDtypeStruct((B_pad, N), jnp.float32),
        grid=grid,
        in_specs=[
            pl.BlockSpec((TB, D), lambda i: (i, 0)),               # x tile
            # NOTE(large D, v7x/v5e): add pipeline_mode=pl.Buffered(1) here and
            # tile over weight blocks (or switch to a direct quadratic-feature
            # tile) once D*(D+1)*n_pad*4 stops being tiny; irrelevant at D=4.
            pl.BlockSpec((D, (D + 1) * n_pad), lambda i: (0, 0)),  # resident weights
            pl.BlockSpec((1, n_pad), lambda i: (0, 0)),            # resident bias
        ],
        out_specs=pl.BlockSpec((TB, N), lambda i: (i, 0)),
        compiler_params=pltpu.CompilerParams(
            dimension_semantics=("parallel",),
            vmem_limit_bytes=32 * 2**20),
        cost_estimate=pl.CostEstimate(flops=flops, transcendentals=0,
                                      bytes_accessed=bytes_accessed),
    )(x_p, w_big, b_row)

    return out if B_pad == B else out[:B]


def polynomial_layer(x, weights, bias, degree):
    """One-shot convenience wrapper (prepack + forward)."""
    w_big, b_row, n_out = prepack_polynomial_params(weights, bias,
                                                    x.shape[1], degree)
    return polynomial_forward(x, w_big, b_row, n_out)


def _reference(x, weights, bias, input_dim, degree):
    """Plain-JAX reference of the PyTorch forward (sanity check)."""
    feats = [x[:, i:i + 1] for i in range(input_dim)]
    for d in range(2, degree + 1):
        for comb in combinations_with_replacement(range(input_dim), d):
            prod = x[:, comb[0]]
            for i in comb[1:]:
                prod = prod * x[:, i]
            feats.append(prod[:, None])
    feat = jnp.concatenate(feats, axis=-1)
    return feat @ weights.T + bias[None, :]


if __name__ == "__main__":
    input_dim = 4
    degree = 2
    num_neurons = 32
    batch = 8

    num_outputs = len(list(combinations_with_replacement(range(input_dim),
                                                         degree))) + input_dim

    key = jax.random.PRNGKey(0)
    kx, kw, kb = jax.random.split(key, 3)
    x = jax.random.normal(kx, (batch, input_dim), dtype=jnp.float32)
    weights = jax.random.normal(kw, (num_neurons, num_outputs),
                                dtype=jnp.float32)
    bias = jax.random.normal(kb, (num_neurons,), dtype=jnp.float32)

    # Prepack once (parameter-init time), then run the Pallas forward.
    w_big, b_row, n_out = prepack_polynomial_params(weights, bias,
                                                    input_dim, degree)
    out = polynomial_forward(x, w_big, b_row, n_out)
    out = jax.block_until_ready(out)

    ref = _reference(x, weights, bias, input_dim, degree)
    assert out.shape == (batch, num_neurons)
    assert jnp.allclose(out, ref, atol=1e-4, rtol=1e-4)

    print("KERNEL_OK")
</pallas_src>

<mosaic_0001>
module attributes {stable_mosaic.version = 11 : i64} {
  func.func @_poly_kernel(%arg0: i32, %arg1: memref<8x4xf32, #tpu.memory_space<vmem>>, %arg2: memref<4x640xf32, #tpu.memory_space<vmem>>, %arg3: memref<1x128xf32, #tpu.memory_space<vmem>>, %arg4: memref<8x32xf32, #tpu.memory_space<vmem>>) attributes {dimension_semantics = [#tpu.dimension_semantics<parallel>], iteration_bounds = array<i64: 1>, scalar_prefetch = 0 : i64, scratch_operands = 0 : i64, tpu.core_type = #tpu.core_type<tc>, window_params = [{transform_indices = @transform_0, window_bounds = array<i64: 8, 4>}, {pipeline_mode = #tpu.pipeline_mode<synchronous>, transform_indices = @transform_1, window_bounds = array<i64: 4, 640>}, {pipeline_mode = #tpu.pipeline_mode<synchronous>, transform_indices = @transform_2, window_bounds = array<i64: 1, 128>}, {transform_indices = @transform_3, window_bounds = array<i64: 8, 32>}]} {
    %c0 = arith.constant 0 : index
    %c0_0 = arith.constant 0 : index
    %0 = vector.load %arg1[%c0, %c0_0] : memref<8x4xf32, #tpu.memory_space<vmem>>, vector<8x4xf32>
    %c0_1 = arith.constant 0 : index
    %c0_2 = arith.constant 0 : index
    %1 = vector.load %arg2[%c0_1, %c0_2] : memref<4x640xf32, #tpu.memory_space<vmem>>, vector<4x128xf32>
    %cst = arith.constant dense<0.000000e+00> : vector<8x128xf32>
    %2 = tpu.matmul %0, %1, %cst {dimension_numbers = #tpu.dot_dimension_numbers<[1], [0], [0], [1], [0, 0, 1, 1], [], []>} : vector<8x4xf32>, vector<4x128xf32>, vector<8x128xf32> -> vector<8x128xf32>
    %c0_3 = arith.constant 0 : index
    %c0_4 = arith.constant 0 : index
    %3 = vector.load %arg3[%c0_3, %c0_4] : memref<1x128xf32, #tpu.memory_space<vmem>>, vector<1x128xf32>
    %4 = vector.broadcast %3 : vector<1x128xf32> to vector<8x128xf32>
    %5 = arith.addf %2, %4 : vector<8x128xf32>
    %c0_5 = arith.constant 0 : index
    %c128 = arith.constant 128 : index
    %6 = vector.load %arg2[%c0_5, %c128] : memref<4x640xf32, #tpu.memory_space<vmem>>, vector<4x128xf32>
    %cst_6 = arith.constant dense<0.000000e+00> : vector<8x128xf32>
    %7 = tpu.matmul %0, %6, %cst_6 {dimension_numbers = #tpu.dot_dimension_numbers<[1], [0], [0], [1], [0, 0, 1, 1], [], []>} : vector<8x4xf32>, vector<4x128xf32>, vector<8x128xf32> -> vector<8x128xf32>
    %8 = vector.extract_strided_slice %0 {offsets = [0, 0], sizes = [8, 1], strides = [1, 1]} : vector<8x4xf32> to vector<8x1xf32>
    %9 = vector.broadcast %8 : vector<8x1xf32> to vector<8x128xf32>
    %10 = arith.mulf %9, %7 : vector<8x128xf32>
    %11 = arith.addf %5, %10 : vector<8x128xf32>
    %c0_7 = arith.constant 0 : index
    %c256 = arith.constant 256 : index
    %12 = vector.load %arg2[%c0_7, %c256] : memref<4x640xf32, #tpu.memory_space<vmem>>, vector<4x128xf32>
    %cst_8 = arith.constant dense<0.000000e+00> : vector<8x128xf32>
    %13 = tpu.matmul %0, %12, %cst_8 {dimension_numbers = #tpu.dot_dimension_numbers<[1], [0], [0], [1], [0, 0, 1, 1], [], []>} : vector<8x4xf32>, vector<4x128xf32>, vector<8x128xf32> -> vector<8x128xf32>
    %14 = vector.extract_strided_slice %0 {offsets = [0, 1], sizes = [8, 1], strides = [1, 1]} : vector<8x4xf32> to vector<8x1xf32>
    %15 = vector.broadcast %14 : vector<8x1xf32> to vector<8x128xf32>
    %16 = arith.mulf %15, %13 : vector<8x128xf32>
    %17 = arith.addf %11, %16 : vector<8x128xf32>
    %c0_9 = arith.constant 0 : index
    %c384 = arith.constant 384 : index
    %18 = vector.load %arg2[%c0_9, %c384] : memref<4x640xf32, #tpu.memory_space<vmem>>, vector<4x128xf32>
    %cst_10 = arith.constant dense<0.000000e+00> : vector<8x128xf32>
    %19 = tpu.matmul %0, %18, %cst_10 {dimension_numbers = #tpu.dot_dimension_numbers<[1], [0], [0], [1], [0, 0, 1, 1], [], []>} : vector<8x4xf32>, vector<4x128xf32>, vector<8x128xf32> -> vector<8x128xf32>
    %20 = vector.extract_strided_slice %0 {offsets = [0, 2], sizes = [8, 1], strides = [1, 1]} : vector<8x4xf32> to vector<8x1xf32>
    %21 = vector.broadcast %20 : vector<8x1xf32> to vector<8x128xf32>
    %22 = arith.mulf %21, %19 : vector<8x128xf32>
    %23 = arith.addf %17, %22 : vector<8x128xf32>
    %c0_11 = arith.constant 0 : index
    %c512 = arith.constant 512 : index
    %24 = vector.load %arg2[%c0_11, %c512] : memref<4x640xf32, #tpu.memory_space<vmem>>, vector<4x128xf32>
    %cst_12 = arith.constant dense<0.000000e+00> : vector<8x128xf32>
    %25 = tpu.matmul %0, %24, %cst_12 {dimension_numbers = #tpu.dot_dimension_numbers<[1], [0], [0], [1], [0, 0, 1, 1], [], []>} : vector<8x4xf32>, vector<4x128xf32>, vector<8x128xf32> -> vector<8x128xf32>
    %26 = vector.extract_strided_slice %0 {offsets = [0, 3], sizes = [8, 1], strides = [1, 1]} : vector<8x4xf32> to vector<8x1xf32>
    %27 = vector.broadcast %26 : vector<8x1xf32> to vector<8x128xf32>
    %28 = arith.mulf %27, %25 : vector<8x128xf32>
    %29 = arith.addf %23, %28 : vector<8x128xf32>
    %30 = vector.extract_strided_slice %29 {offsets = [0, 0], sizes = [8, 32], strides = [1, 1]} : vector<8x128xf32> to vector<8x32xf32>
    %c0_13 = arith.constant 0 : index
    %c0_14 = arith.constant 0 : index
    %31 = vector.load %arg4[%c0_13, %c0_14] : memref<8x32xf32, #tpu.memory_space<vmem>>, vector<8x32xf32>
    tpu.vector_store %arg4[%c0_13, %c0_14], %30 {strides = array<i32>} : memref<8x32xf32, #tpu.memory_space<vmem>>, vector<8x32xf32>,
    return
  }
  func.func @transform_0(%arg0: i32) -> (i32, i32) {
    %c0_i32 = arith.constant 0 : i32
    %c0_i32_0 = arith.constant 0 : i32
    return %arg0, %c0_i32 : i32, i32
  }
  func.func @transform_1(%arg0: i32) -> (i32, i32) {
    %c0_i32 = arith.constant 0 : i32
    %c0_i32_0 = arith.constant 0 : i32
    %c0_i32_1 = arith.constant 0 : i32
    return %c0_i32, %c0_i32_0 : i32, i32
  }
  func.func @transform_2(%arg0: i32) -> (i32, i32) {
    %c0_i32 = arith.constant 0 : i32
    %c0_i32_0 = arith.constant 0 : i32
    %c0_i32_1 = arith.constant 0 : i32
    return %c0_i32, %c0_i32_0 : i32, i32
  }
  func.func @transform_3(%arg0: i32) -> (i32, i32) {
    %c0_i32 = arith.constant 0 : i32
    %c0_i32_0 = arith.constant 0 : i32
    return %arg0, %c0_i32 : i32, i32
  }
}

</mosaic_0001>

<llo_original>
// kernel: tpu_custom_call.1
$region0: #{tpu_custom_call.1}
  #allocation0 [shape = 'u32[]', space=smem, size = 0x4, offset = 0x4, fixed_abs, tag = 'smem constant byte address 0x4 - core index']
  #allocation1 [shape = 'u32[144,128]{1,0:T(1,128)}', space=vmem, size = 0x12000, scoped, tag = 'internal scratch']
  %s0 = inlined_call_operand.vmem [shape: f32[8,4], index: 0, kind: input, shape index: {}]
  %s1 = inlined_call_operand.hbm [shape: f32[4,640], index: 1, kind: input, shape index: {}]
  %s2 = inlined_call_operand.vmem [shape: f32[1,128], index: 2, kind: input, shape index: {}]
  %s3 = inlined_call_operand.hbm [shape: f32[8,32], index: 3, kind: output, shape index: {}]
  %s4 = sld [smem:[#allocation0]]
  $region26: #{tpu_custom_call.1} parent=0
    _
  %s6 = ssub.s32 1, %s4
  %s7 = scalar_select 0, %s6, %s4
  $region1: #{tpu_custom_call.1} parent=0
    #allocation2 [shape = 'u8[10240]{0}', space=vmem, size = 0x2800, scoped, tag = 'input window, operand 1, single buffered']
    #allocation3 [shape = 's32[1]{0}', space=sflag, size = 0x4, scoped, tag = 'scoped memory for tpu_custom_call.1']
    #allocation4 [shape = 's32[1]{0}', space=sflag, size = 0x4, scoped, tag = 'scoped memory for tpu_custom_call.1']
    #allocation5 [shape = 'u8[4096]{0}', space=vmem, size = 0x1000, scoped, tag = 'output window, operand 0, single buffered']
    %8 = vsyncpa [#allocation3], 0
    %9 = vsyncpa [#allocation4], 0
    // Predicated region
    $region2: #{tpu_custom_call.1} parent=1 // pred_check
      _
    $region3: #{tpu_custom_call.1} parent=1 // pred_check_branch
      %11 = sbr.rel (0) target = $region5
    $region4: #{tpu_custom_call.1} parent=1 // pred_region
      _
    $region5: #{tpu_custom_call.1} parent=1 // pred_fallthru
      _
    // Predicated region
    $region6: #{tpu_custom_call.1} parent=1 // pred_check
      _
    $region7: #{tpu_custom_call.1} parent=1 // pred_check_branch
      %13 = sbr.rel (0) target = $region9
    $region8: #{tpu_custom_call.1} parent=1 // pred_region
      %s15 = ssub.s32 320, 320
      %16 = vsyncadd [#allocation3], %s15
      %s18 = sshll.u32 [#allocation2], 4
      %s19 = int_to_ptr.vmem [resolvable:$true] %s18
      %21 = dma.hbm_to_vmem [thread:$0]  %s1, 320, %s19, [#allocation3]
    $region9: #{tpu_custom_call.1} parent=1 // pred_fallthru
      _
    // Predicated region
    $region10: #{tpu_custom_call.1} parent=1 // pred_check
      _
    $region11: #{tpu_custom_call.1} parent=1 // pred_check_branch
      %23 = sbr.rel (0) target = $region13
    $region12: #{tpu_custom_call.1} parent=1 // pred_region
      _
    $region13: #{tpu_custom_call.1} parent=1 // pred_fallthru
      _
    // Predicated region
    $region14: #{tpu_custom_call.1} parent=1 // pred_check
      _
    $region15: #{tpu_custom_call.1} parent=1 // pred_check_branch
      %25 = sbr.rel (0) target = $region17
    $region16: #{tpu_custom_call.1} parent=1 // pred_region
      %26 = dma.done [#allocation3], 320
    $region17: #{tpu_custom_call.1} parent=1 // pred_fallthru
      _
    %v27 = vld [vmem:[%s0] sm:$0xff]
    %v28 = vld [vmem:[#allocation2] sm:$0xf]
    %v29 = vld [vmem:[%s2] sm:$0x1]
    %v31 = vlaneseq
    %v32 = vshrl.u32 %v31, 7
    %v33 = vsub.s32 0, %v32
    %v34 = vrot.slane %v29, %v33
    %vm36 = vcmask 31744
    %v38 = vsel %vm36, %v27, 0
    %vm40 = vcmask 1043456
    %v42 = vsel %vm40, %v28, 0
    %44 = vmatprep.subr.mxu0 0.0
    %45 = vmatpush1.msra.mxu0 %v42
    %46 = vmatprep.subr.mxu0 0.0
    %47 = vmatpush1.msra.mxu0 0.0
    %48 = vmatprep.subr.mxu0 0.0
    %49 = vmatpush1.msra.mxu0 0.0
    %50 = vmatprep.subr.mxu0 0.0
    %51 = vmatpush1.msra.mxu0 0.0
    %52 = vmatprep.subr.mxu0 0.0
    %53 = vmatpush1.msra.mxu0 0.0
    %54 = vmatprep.subr.mxu0 0.0
    %55 = vmatpush1.msra.mxu0 0.0
    %56 = vmatprep.subr.mxu0 0.0
    %57 = vmatpush1.msra.mxu0 0.0
    %58 = vmatprep.subr.mxu0 0.0
    %59 = vmatpush1.msra.mxu0 0.0
    %60 = vmatprep.subr.mxu0 0.0
    %61 = vmatpush1.msra.mxu0 0.0
    %62 = vmatprep.subr.mxu0 0.0
    %63 = vmatpush1.msra.mxu0 0.0
    %64 = vmatprep.subr.mxu0 0.0
    %65 = vmatpush1.msra.mxu0 0.0
    %66 = vmatprep.subr.mxu0 0.0
    %67 = vmatpush1.msra.mxu0 0.0
    %68 = vmatprep.subr.mxu0 0.0
    %69 = vmatpush1.msra.mxu0 0.0
    %70 = vmatprep.subr.mxu0 0.0
    %71 = vmatpush1.msra.mxu0 0.0
    %72 = vmatprep.subr.mxu0 0.0
    %73 = vmatpush1.msra.mxu0 0.0
    %74 = vmatprep.subr.mxu0 0.0
    %75 = vmatpush1.msra.mxu0 0.0
    %76 = vmatprep.subr.mxu0 0.0
    %77 = vmatpush1.msra.mxu0 0.0
    %78 = vmatprep.subr.mxu0 0.0
    %79 = vmatpush1.msra.mxu0 0.0
    %80 = vmatprep.subr.mxu0 0.0
    %81 = vmatpush1.msra.mxu0 0.0
    %82 = vmatprep.subr.mxu0 0.0
    %83 = vmatpush1.msra.mxu0 0.0
    %84 = vmatprep.subr.mxu0 0.0
    %85 = vmatpush1.msra.mxu0 0.0
    %86 = vmatprep.subr.mxu0 0.0
    %87 = vmatpush1.msra.mxu0 0.0
    %88 = vmatprep.subr.mxu0 0.0
    %89 = vmatpush1.msra.mxu0 0.0
    %90 = vmatprep.subr.mxu0 0.0
    %91 = vmatpush1.msra.mxu0 0.0
    %92 = vmatprep.subr.mxu0 0.0
    %93 = vmatpush1.msra.mxu0 0.0
    %94 = vmatprep.subr.mxu0 0.0
    %95 = vmatpush1.msra.mxu0 0.0
    %96 = vmatprep.subr.mxu0 0.0
    %97 = vmatpush1.msra.mxu0 0.0
    %98 = vmatprep.subr.mxu0 0.0
    %99 = vmatpush1.msra.mxu0 0.0
    %100 = vmatprep.subr.mxu0 0.0
    %101 = vmatpush1.msra.mxu0 0.0
    %102 = vmatprep.subr.mxu0 0.0
    %103 = vmatpush1.msra.mxu0 0.0
    %104 = vmatprep.subr.mxu0 0.0
    %105 = vmatpush1.msra.mxu0 0.0
    %106 = vmatprep.subr.mxu0 0.0
    %107 = vmatpush1.msra.mxu0 0.0
    %108 = vmatprep.mubr.f32.mxu0 0.0
    %109 = vmatmul.mubr.f32.gmra.mrb[0].mxu0 %v38
    %v110 = vpop.f32.mrb[0].mxu0
    %v111 = vadd.f32 %v34, %v110
    %v112 = vpop.f32.mrb[0].mxu0
    %113 = vdwg.mxu0
    %v114 = vld [vmem:[#allocation2 + $0x4] sm:$0xf]
    %v116 = vsel %vm40, %v114, 0
    %118 = vmatprep.subr.mxu0 0.0
    %119 = vmatpush1.msra.mxu0 %v116
    %120 = vmatprep.subr.mxu0 0.0
    %121 = vmatpush1.msra.mxu0 0.0
    %122 = vmatprep.subr.mxu0 0.0
    %123 = vmatpush1.msra.mxu0 0.0
    %124 = vmatprep.subr.mxu0 0.0
    %125 = vmatpush1.msra.mxu0 0.0
    %126 = vmatprep.subr.mxu0 0.0
    %127 = vmatpush1.msra.mxu0 0.0
    %128 = vmatprep.subr.mxu0 0.0
    %129 = vmatpush1.msra.mxu0 0.0
    %130 = vmatprep.subr.mxu0 0.0
    %131 = vmatpush1.msra.mxu0 0.0
    %132 = vmatprep.subr.mxu0 0.0
    %133 = vmatpush1.msra.mxu0 0.0
    %134 = vmatprep.subr.mxu0 0.0
    %135 = vmatpush1.msra.mxu0 0.0
    %136 = vmatprep.subr.mxu0 0.0
    %137 = vmatpush1.msra.mxu0 0.0
    %138 = vmatprep.subr.mxu0 0.0
    %139 = vmatpush1.msra.mxu0 0.0
    %140 = vmatprep.subr.mxu0 0.0
    %141 = vmatpush1.msra.mxu0 0.0
    %142 = vmatprep.subr.mxu0 0.0
    %143 = vmatpush1.msra.mxu0 0.0
    %144 = vmatprep.subr.mxu0 0.0
    %145 = vmatpush1.msra.mxu0 0.0
    %146 = vmatprep.subr.mxu0 0.0
    %147 = vmatpush1.msra.mxu0 0.0
    %148 = vmatprep.subr.mxu0 0.0
    %149 = vmatpush1.msra.mxu0 0.0
    %150 = vmatprep.subr.mxu0 0.0
    %151 = vmatpush1.msra.mxu0 0.0
    %152 = vmatprep.subr.mxu0 0.0
    %153 = vmatpush1.msra.mxu0 0.0
    %154 = vmatprep.subr.mxu0 0.0
    %155 = vmatpush1.msra.mxu0 0.0
    %156 = vmatprep.subr.mxu0 0.0
    %157 = vmatpush1.msra.mxu0 0.0
    %158 = vmatprep.subr.mxu0 0.0
    %159 = vmatpush1.msra.mxu0 0.0
    %160 = vmatprep.subr.mxu0 0.0
    %161 = vmatpush1.msra.mxu0 0.0
    %162 = vmatprep.subr.mxu0 0.0
    %163 = vmatpush1.msra.mxu0 0.0
    %164 = vmatprep.subr.mxu0 0.0
    %165 = vmatpush1.msra.mxu0 0.0
    %166 = vmatprep.subr.mxu0 0.0
    %167 = vmatpush1.msra.mxu0 0.0
    %168 = vmatprep.subr.mxu0 0.0
    %169 = vmatpush1.msra.mxu0 0.0
    %170 = vmatprep.subr.mxu0 0.0
    %171 = vmatpush1.msra.mxu0 0.0
    %172 = vmatprep.subr.mxu0 0.0
    %173 = vmatpush1.msra.mxu0 0.0
    %174 = vmatprep.subr.mxu0 0.0
    %175 = vmatpush1.msra.mxu0 0.0
    %176 = vmatprep.subr.mxu0 0.0
    %177 = vmatpush1.msra.mxu0 0.0
    %178 = vmatprep.subr.mxu0 0.0
    %179 = vmatpush1.msra.mxu0 0.0
    %180 = vmatprep.subr.mxu0 0.0
    %181 = vmatpush1.msra.mxu0 0.0
    %182 = vmatprep.mubr.f32.mxu0 0.0
    %183 = vmatmul.mubr.f32.gmra.mrb[0].mxu0 %v38
    %v184 = vpop.f32.mrb[0].mxu0
    %v185 = vadd.f32 0.0, %v184
    %v186 = vpop.f32.mrb[0].mxu0
    %187 = vdwg.mxu0
    %188 = vset.pattern.permute.xlu0 0
    %189 = vperm.xlu0 %188, %v27
    %v190 = vpop.permute.xlu0 %189
    %v192 = vmul.f32 %v190, %v185
    %v193 = vadd.f32 %v111, %v192
    %v194 = vld [vmem:[#allocation2 + $0x8] sm:$0xf]
    %v196 = vsel %vm40, %v194, 0
    %198 = vmatprep.subr.mxu0 0.0
    %199 = vmatpush1.msra.mxu0 %v196
    %200 = vmatprep.subr.mxu0 0.0
    %201 = vmatpush1.msra.mxu0 0.0
    %202 = vmatprep.subr.mxu0 0.0
    %203 = vmatpush1.msra.mxu0 0.0
    %204 = vmatprep.subr.mxu0 0.0
    %205 = vmatpush1.msra.mxu0 0.0
    %206 = vmatprep.subr.mxu0 0.0
    %207 = vmatpush1.msra.mxu0 0.0
    %208 = vmatprep.subr.mxu0 0.0
    %209 = vmatpush1.msra.mxu0 0.0
    %210 = vmatprep.subr.mxu0 0.0
    %211 = vmatpush1.msra.mxu0 0.0
    %212 = vmatprep.subr.mxu0 0.0
    %213 = vmatpush1.msra.mxu0 0.0
    %214 = vmatprep.subr.mxu0 0.0
    %215 = vmatpush1.msra.mxu0 0.0
    %216 = vmatprep.subr.mxu0 0.0
    %217 = vmatpush1.msra.mxu0 0.0
    %218 = vmatprep.subr.mxu0 0.0
    %219 = vmatpush1.msra.mxu0 0.0
    %220 = vmatprep.subr.mxu0 0.0
    %221 = vmatpush1.msra.mxu0 0.0
    %222 = vmatprep.subr.mxu0 0.0
    %223 = vmatpush1.msra.mxu0 0.0
    %224 = vmatprep.subr.mxu0 0.0
    %225 = vmatpush1.msra.mxu0 0.0
    %226 = vmatprep.subr.mxu0 0.0
    %227 = vmatpush1.msra.mxu0 0.0
    %228 = vmatprep.subr.mxu0 0.0
    %229 = vmatpush1.msra.mxu0 0.0
    %230 = vmatprep.subr.mxu0 0.0
    %231 = vmatpush1.msra.mxu0 0.0
    %232 = vmatprep.subr.mxu0 0.0
    %233 = vmatpush1.msra.mxu0 0.0
    %234 = vmatprep.subr.mxu0 0.0
    %235 = vmatpush1.msra.mxu0 0.0
    %236 = vmatprep.subr.mxu0 0.0
    %237 = vmatpush1.msra.mxu0 0.0
    %238 = vmatprep.subr.mxu0 0.0
    %239 = vmatpush1.msra.mxu0 0.0
    %240 = vmatprep.subr.mxu0 0.0
    %241 = vmatpush1.msra.mxu0 0.0
    %242 = vmatprep.subr.mxu0 0.0
    %243 = vmatpush1.msra.mxu0 0.0
    %244 = vmatprep.subr.mxu0 0.0
    %245 = vmatpush1.msra.mxu0 0.0
    %246 = vmatprep.subr.mxu0 0.0
    %247 = vmatpush1.msra.mxu0 0.0
    %248 = vmatprep.subr.mxu0 0.0
    %249 = vmatpush1.msra.mxu0 0.0
    %250 = vmatprep.subr.mxu0 0.0
    %251 = vmatpush1.msra.mxu0 0.0
    %252 = vmatprep.subr.mxu0 0.0
    %253 = vmatpush1.msra.mxu0 0.0
    %254 = vmatprep.subr.mxu0 0.0
    %255 = vmatpush1.msra.mxu0 0.0
    %256 = vmatprep.subr.mxu0 0.0
    %257 = vmatpush1.msra.mxu0 0.0
    %258 = vmatprep.subr.mxu0 0.0
    %259 = vmatpush1.msra.mxu0 0.0
    %260 = vmatprep.subr.mxu0 0.0
    %261 = vmatpush1.msra.mxu0 0.0
    %262 = vmatprep.mubr.f32.mxu0 0.0
    %263 = vmatmul.mubr.f32.gmra.mrb[0].mxu0 %v38
    %v264 = vpop.f32.mrb[0].mxu0
    %v265 = vadd.f32 0.0, %v264
    %v266 = vpop.f32.mrb[0].mxu0
    %267 = vdwg.mxu0
    %268 = vset.pattern.permute.xlu0 1
    %269 = vperm.xlu0 %268, %v27
    %v270 = vpop.permute.xlu0 %269
    %v272 = vmul.f32 %v270, %v265
    %v273 = vadd.f32 %v193, %v272
    %v274 = vld [vmem:[#allocation2 + $0xc] sm:$0xf]
    %v276 = vsel %vm40, %v274, 0
    %278 = vmatprep.subr.mxu0 0.0
    %279 = vmatpush1.msra.mxu0 %v276
    %280 = vmatprep.subr.mxu0 0.0
    %281 = vmatpush1.msra.mxu0 0.0
    %282 = vmatprep.subr.mxu0 0.0
    %283 = vmatpush1.msra.mxu0 0.0
    %284 = vmatprep.subr.mxu0 0.0
    %285 = vmatpush1.msra.mxu0 0.0
    %286 = vmatprep.subr.mxu0 0.0
    %287 = vmatpush1.msra.mxu0 0.0
    %288 = vmatprep.subr.mxu0 0.0
    %289 = vmatpush1.msra.mxu0 0.0
    %290 = vmatprep.subr.mxu0 0.0
    %291 = vmatpush1.msra.mxu0 0.0
    %292 = vmatprep.subr.mxu0 0.0
    %293 = vmatpush1.msra.mxu0 0.0
    %294 = vmatprep.subr.mxu0 0.0
    %295 = vmatpush1.msra.mxu0 0.0
    %296 = vmatprep.subr.mxu0 0.0
    %297 = vmatpush1.msra.mxu0 0.0
    %298 = vmatprep.subr.mxu0 0.0
    %299 = vmatpush1.msra.mxu0 0.0
    %300 = vmatprep.subr.mxu0 0.0
    %301 = vmatpush1.msra.mxu0 0.0
    %302 = vmatprep.subr.mxu0 0.0
    %303 = vmatpush1.msra.mxu0 0.0
    %304 = vmatprep.subr.mxu0 0.0
    %305 = vmatpush1.msra.mxu0 0.0
    %306 = vmatprep.subr.mxu0 0.0
    %307 = vmatpush1.msra.mxu0 0.0
    %308 = vmatprep.subr.mxu0 0.0
    %309 = vmatpush1.msra.mxu0 0.0
    %310 = vmatprep.subr.mxu0 0.0
    %311 = vmatpush1.msra.mxu0 0.0
    %312 = vmatprep.subr.mxu0 0.0
    %313 = vmatpush1.msra.mxu0 0.0
    %314 = vmatprep.subr.mxu0 0.0
    %315 = vmatpush1.msra.mxu0 0.0
    %316 = vmatprep.subr.mxu0 0.0
    %317 = vmatpush1.msra.mxu0 0.0
    %318 = vmatprep.subr.mxu0 0.0
    %319 = vmatpush1.msra.mxu0 0.0
    %320 = vmatprep.subr.mxu0 0.0
    %321 = vmatpush1.msra.mxu0 0.0
    %322 = vmatprep.subr.mxu0 0.0
    %323 = vmatpush1.msra.mxu0 0.0
    %324 = vmatprep.subr.mxu0 0.0
    %325 = vmatpush1.msra.mxu0 0.0
    %326 = vmatprep.subr.mxu0 0.0
    %327 = vmatpush1.msra.mxu0 0.0
    %328 = vmatprep.subr.mxu0 0.0
    %329 = vmatpush1.msra.mxu0 0.0
    %330 = vmatprep.subr.mxu0 0.0
    %331 = vmatpush1.msra.mxu0 0.0
    %332 = vmatprep.subr.mxu0 0.0
    %333 = vmatpush1.msra.mxu0 0.0
    %334 = vmatprep.subr.mxu0 0.0
    %335 = vmatpush1.msra.mxu0 0.0
    %336 = vmatprep.subr.mxu0 0.0
    %337 = vmatpush1.msra.mxu0 0.0
    %338 = vmatprep.subr.mxu0 0.0
    %339 = vmatpush1.msra.mxu0 0.0
    %340 = vmatprep.subr.mxu0 0.0
    %341 = vmatpush1.msra.mxu0 0.0
    %342 = vmatprep.mubr.f32.mxu0 0.0
    %343 = vmatmul.mubr.f32.gmra.mrb[0].mxu0 %v38
    %v344 = vpop.f32.mrb[0].mxu0
    %v345 = vadd.f32 0.0, %v344
    %v346 = vpop.f32.mrb[0].mxu0
    %347 = vdwg.mxu0
    %348 = vset.pattern.permute.xlu0 2
    %349 = vperm.xlu0 %348, %v27
    %v350 = vpop.permute.xlu0 %349
    %v352 = vmul.f32 %v350, %v345
    %v353 = vadd.f32 %v273, %v352
    %v354 = vld [vmem:[#allocation2 + $0x10] sm:$0xf]
    %v356 = vsel %vm40, %v354, 0
    %358 = vmatprep.subr.mxu0 0.0
    %359 = vmatpush1.msra.mxu0 %v356
    %360 = vmatprep.subr.mxu0 0.0
    %361 = vmatpush1.msra.mxu0 0.0
    %362 = vmatprep.subr.mxu0 0.0
    %363 = vmatpush1.msra.mxu0 0.0
    %364 = vmatprep.subr.mxu0 0.0
    %365 = vmatpush1.msra.mxu0 0.0
    %366 = vmatprep.subr.mxu0 0.0
    %367 = vmatpush1.msra.mxu0 0.0
    %368 = vmatprep.subr.mxu0 0.0
    %369 = vmatpush1.msra.mxu0 0.0
    %370 = vmatprep.subr.mxu0 0.0
    %371 = vmatpush1.msra.mxu0 0.0
    %372 = vmatprep.subr.mxu0 0.0
    %373 = vmatpush1.msra.mxu0 0.0
    %374 = vmatprep.subr.mxu0 0.0
    %375 = vmatpush1.msra.mxu0 0.0
    %376 = vmatprep.subr.mxu0 0.0
    %377 = vmatpush1.msra.mxu0 0.0
    %378 = vmatprep.subr.mxu0 0.0
    %379 = vmatpush1.msra.mxu0 0.0
    %380 = vmatprep.subr.mxu0 0.0
    %381 = vmatpush1.msra.mxu0 0.0
    %382 = vmatprep.subr.mxu0 0.0
    %383 = vmatpush1.msra.mxu0 0.0
    %384 = vmatprep.subr.mxu0 0.0
    %385 = vmatpush1.msra.mxu0 0.0
    %386 = vmatprep.subr.mxu0 0.0
    %387 = vmatpush1.msra.mxu0 0.0
    %388 = vmatprep.subr.mxu0 0.0
    %389 = vmatpush1.msra.mxu0 0.0
    %390 = vmatprep.subr.mxu0 0.0
    %391 = vmatpush1.msra.mxu0 0.0
    %392 = vmatprep.subr.mxu0 0.0
    %393 = vmatpush1.msra.mxu0 0.0
    %394 = vmatprep.subr.mxu0 0.0
    %395 = vmatpush1.msra.mxu0 0.0
    %396 = vmatprep.subr.mxu0 0.0
    %397 = vmatpush1.msra.mxu0 0.0
    %398 = vmatprep.subr.mxu0 0.0
    %399 = vmatpush1.msra.mxu0 0.0
    %400 = vmatprep.subr.mxu0 0.0
    %401 = vmatpush1.msra.mxu0 0.0
    %402 = vmatprep.subr.mxu0 0.0
    %403 = vmatpush1.msra.mxu0 0.0
    %404 = vmatprep.subr.mxu0 0.0
    %405 = vmatpush1.msra.mxu0 0.0
    %406 = vmatprep.subr.mxu0 0.0
    %407 = vmatpush1.msra.mxu0 0.0
    %408 = vmatprep.subr.mxu0 0.0
    %409 = vmatpush1.msra.mxu0 0.0
    %410 = vmatprep.subr.mxu0 0.0
    %411 = vmatpush1.msra.mxu0 0.0
    %412 = vmatprep.subr.mxu0 0.0
    %413 = vmatpush1.msra.mxu0 0.0
    %414 = vmatprep.subr.mxu0 0.0
    %415 = vmatpush1.msra.mxu0 0.0
    %416 = vmatprep.subr.mxu0 0.0
    %417 = vmatpush1.msra.mxu0 0.0
    %418 = vmatprep.subr.mxu0 0.0
    %419 = vmatpush1.msra.mxu0 0.0
    %420 = vmatprep.subr.mxu0 0.0
    %421 = vmatpush1.msra.mxu0 0.0
    %422 = vmatprep.mubr.f32.mxu0 0.0
    %423 = vmatmul.mubr.f32.gmra.mrb[0].mxu0 %v38
    %v424 = vpop.f32.mrb[0].mxu0
    %v425 = vadd.f32 0.0, %v424
    %v426 = vpop.f32.mrb[0].mxu0
    %427 = vdwg.mxu0
    %428 = vset.pattern.permute.xlu0 3
    %429 = vperm.xlu0 %428, %v27
    %v430 = vpop.permute.xlu0 %429
    %v432 = vmul.f32 %v430, %v425
    %v433 = vadd.f32 %v353, %v432
    %vm434 = vcmask 261120
    %435 = vst.msk [vmem:[#allocation5] sm:$0xff] %vm434, %v433
    // Predicated region
    $region18: #{tpu_custom_call.1} parent=1 // pred_check
      _
    $region19: #{tpu_custom_call.1} parent=1 // pred_check_branch
      %437 = sbr.rel (0) target = $region21
    $region20: #{tpu_custom_call.1} parent=1 // pred_region
      %s439 = ssub.s32 128, 128
      %440 = vsyncadd [#allocation4], %s439
      %s442 = sshll.u32 [#allocation5], 4
      %s443 = int_to_ptr.vmem [resolvable:$true] %s442
      %445 = dma.vmem_to_hbm [thread:$0]  %s443, 128, %s3, [#allocation4]
    $region21: #{tpu_custom_call.1} parent=1 // pred_fallthru
      _
    // Predicated region
    $region22: #{tpu_custom_call.1} parent=1 // pred_check
      _
    $region23: #{tpu_custom_call.1} parent=1 // pred_check_branch
      %447 = sbr.rel (0) target = $region25
    $region24: #{tpu_custom_call.1} parent=1 // pred_region
      %448 = dma.done [#allocation4], 128
    $region25: #{tpu_custom_call.1} parent=1 // pred_fallthru
      _
    %449 = vsyncpa [#allocation3], 1
    %450 = vsyncpa [#allocation4], 1

</llo_original>
